<compile_context>
chip_gen: v5e
topology: v5e:2x2
jax: 0.10.0
libtpu: 0.0.40
codegen_flags: <defaults>
</compile_context>

<pallas_src>
import functools

import jax
import jax.numpy as jnp
from jax.experimental import pallas as pl
from jax.experimental.pallas import tpu as pltpu

LN_EPS = 1e-5
MXU_DTYPE = jnp.bfloat16  # matmul operand dtype (f32 accumulation via preferred_element_type)


def _round_up(x, m):
    return (x + m - 1) // m * m


def _fused_layernorm(x, gamma, beta, n_valid):
    """Single-pass LayerNorm over the last dim.

    Only the first `n_valid` lanes of x are (possibly) non-zero; the rest are exact
    zeros, so sums over the full padded lane dim equal sums over the real features.
    gamma/beta are zero in padded lanes, so padded lanes of the result stay zero.
    """
    inv_n = 1.0 / float(n_valid)
    s = jnp.sum(x, axis=-1, keepdims=True)
    sq = jnp.sum(x * x, axis=-1, keepdims=True)
    mean = s * inv_n
    var = sq * inv_n - mean * mean
    inv = jax.lax.rsqrt(var + LN_EPS)
    return (x - mean) * inv * gamma + beta


def _dyn_kernel(
    hidden_real, dyn_hidden_real,
    x_ref,        # [TB, XP]  packed [state | action | zeros], f32
    w1_ref,       # [XP, DP]  fc1 weight, state rows stacked over action rows, bf16
    vd_ref,       # [8,  DP]  rows: b1, g1, be1, 0...
    w2_ref,       # [DP, HP]  bf16 (zero-padded)
    vh_ref,       # [8,  HP]  rows: b2, rb1, rg1, rbe1, rb2, rg2, rbe2, 0
    rw1_ref,      # [HP, HP]  bf16 (zero-padded)
    rw2_ref,      # [HP, HP]  bf16 (zero-padded)
    out_ref,      # [TB, HP]  f32
):
    tb, hp = out_ref.shape
    x = x_ref[...]                                   # [TB, XP] f32

    vd = vd_ref[...]
    vh = vh_ref[...]
    b1, g1, be1 = vd[0:1], vd[1:2], vd[2:3]
    b2, rb1, rg1, rbe1, rb2, rg2, rbe2 = (vh[i:i + 1] for i in range(7))

    # ---- fc1 on the packed [state|action] slab (concat fused into the layout) ----
    h = jnp.dot(x.astype(MXU_DTYPE), w1_ref[...],
                preferred_element_type=jnp.float32) + b1
    h = _fused_layernorm(h, g1, be1, dyn_hidden_real)      # LN over full dyn_hidden
    h = jnp.maximum(h, 0.0)
    h = jnp.dot(h.astype(MXU_DTYPE), w2_ref[...],
                preferred_element_type=jnp.float32) + b2   # padded lanes stay 0

    # ---- next_state = state + fc2(...); zero action/pad lanes so LN sums stay exact ----
    lane = jax.lax.broadcasted_iota(jnp.int32, (tb, hp), 1)
    state = jnp.where(lane < hidden_real, x[:, :hp], 0.0)
    ns = state + h                                          # padded lanes stay 0

    # ---- resblock: relu(LN2(fc2(relu(LN1(fc1(ns))))) + ns) ----
    r = jnp.dot(ns.astype(MXU_DTYPE), rw1_ref[...],
                preferred_element_type=jnp.float32) + rb1
    r = _fused_layernorm(r, rg1, rbe1, hidden_real)         # masked divisor = real H
    r = jnp.maximum(r, 0.0)
    r = jnp.dot(r.astype(MXU_DTYPE), rw2_ref[...],
                preferred_element_type=jnp.float32) + rb2
    r = _fused_layernorm(r, rg2, rbe2, hidden_real)
    out_ref[...] = jnp.maximum(r + ns, 0.0)


def trading_dynamics_forward(state, action, params, *, block_b=512):
    """state: [B, H] f32, action: [B, A] f32 (assumed one-hot, but any vector works).
    Returns next_state: [B, H] f32."""
    B, H = state.shape
    A = action.shape[1]
    D = params["b1"].shape[-1]                  # dyn_hidden
    HP = _round_up(H, 128)                      # lane-dense hidden width
    XP = _round_up(H + A, 128)                  # lane-dense packed [state|action] width
    DP = _round_up(D, 128)                      # lane-dense dyn_hidden width
    TB = min(_round_up(block_b, 8), _round_up(B, 8))
    BP = _round_up(B, TB)

    f32 = jnp.float32

    # Packed activation slab [state | action | zeros]; padded rows/lanes are exact zeros.
    x_p = jnp.zeros((BP, XP), f32)
    x_p = x_p.at[:B, :H].set(state.astype(f32))
    x_p = x_p.at[:B, H:H + A].set(action.astype(f32))

    def pad_w(w, rows, cols):
        out = jnp.zeros((rows, cols), MXU_DTYPE)
        return out.at[: w.shape[0], : w.shape[1]].set(w.astype(MXU_DTYPE))

    # fc1 weight with the state rows on top and the action rows immediately below,
    # matching the packed input layout.
    w1 = jnp.zeros((XP, DP), MXU_DTYPE)
    w1 = w1.at[:H, :D].set(params["w1_state"].astype(MXU_DTYPE))
    w1 = w1.at[H:H + A, :D].set(params["w1_action"].astype(MXU_DTYPE))

    w2 = pad_w(params["w2"], DP, HP)
    rw1 = pad_w(params["rw1"], HP, HP)
    rw2 = pad_w(params["rw2"], HP, HP)

    def pack_vecs(vecs, cols):
        out = jnp.zeros((8, cols), f32)
        for i, v in enumerate(vecs):
            out = out.at[i, : v.shape[-1]].set(v.reshape(-1).astype(f32))
        return out

    vec_d = pack_vecs([params["b1"], params["g1"], params["be1"]], DP)
    vec_h = pack_vecs([params["b2"], params["rb1"], params["rg1"], params["rbe1"],
                       params["rb2"], params["rg2"], params["rbe2"]], HP)

    const = lambda shape: pl.BlockSpec(shape, lambda i: (0, 0))

    kernel = functools.partial(_dyn_kernel, H, D)
    out_p = pl.pallas_call(
        kernel,
        out_shape=jax.ShapeDtypeStruct((BP, HP), jnp.float32),
        grid=(BP // TB,),
        in_specs=[
            pl.BlockSpec((TB, XP), lambda i: (i, 0)),   # packed [state|action]
            const((XP, DP)),                            # w1 (state rows + action rows)
            const((8, DP)),                             # [b1; g1; be1]
            const((DP, HP)),                            # w2
            const((8, HP)),                             # [b2; rb1; rg1; rbe1; rb2; rg2; rbe2]
            const((HP, HP)),                            # rw1
            const((HP, HP)),                            # rw2
        ],
        out_specs=pl.BlockSpec((TB, HP), lambda i: (i, 0)),
        compiler_params=pltpu.CompilerParams(dimension_semantics=("parallel",)),
    )(x_p, w1, vec_d, w2, vec_h, rw1, rw2)
    return out_p[:B, :H]


def init_params(key, hidden_size, action_size, dyn_hidden_size=128):
    """PyTorch-style init. Linear weights stored as [in, out] so kernels compute x @ W + b.
    fc1 is stored pre-split into its state / action row blocks."""
    ks = jax.random.split(key, 8)

    def linear(k, fan_in, fan_out):
        bound = 1.0 / jnp.sqrt(fan_in)
        k_w, k_b = jax.random.split(k)
        w = jax.random.uniform(k_w, (fan_in, fan_out), jnp.float32, -bound, bound)
        b = jax.random.uniform(k_b, (1, fan_out), jnp.float32, -bound, bound)
        return w, b

    w1, b1 = linear(ks[0], hidden_size + action_size, dyn_hidden_size)
    w2, b2 = linear(ks[1], dyn_hidden_size, hidden_size)
    rw1, rb1 = linear(ks[2], hidden_size, hidden_size)
    rw2, rb2 = linear(ks[3], hidden_size, hidden_size)
    return dict(
        w1_state=w1[:hidden_size], w1_action=w1[hidden_size:], b1=b1,
        g1=jnp.ones((1, dyn_hidden_size), jnp.float32),
        be1=jnp.zeros((1, dyn_hidden_size), jnp.float32),
        w2=w2, b2=b2,
        rw1=rw1, rb1=rb1,
        rg1=jnp.ones((1, hidden_size), jnp.float32),
        rbe1=jnp.zeros((1, hidden_size), jnp.float32),
        rw2=rw2, rb2=rb2,
        rg2=jnp.ones((1, hidden_size), jnp.float32),
        rbe2=jnp.zeros((1, hidden_size), jnp.float32),
    )


def reference_forward(state, action, p):
    """Pure-JAX reference mirroring the PyTorch module with the same bf16-operand /
    f32-accumulate matmul policy as the kernel (for tight correctness comparison)."""
    def dot(a, w):
        return jnp.dot(a.astype(MXU_DTYPE), w.astype(MXU_DTYPE),
                       preferred_element_type=jnp.float32)

    def ln(x, g, b):
        mean = jnp.mean(x, -1, keepdims=True)
        var = jnp.mean(x * x, -1, keepdims=True) - mean * mean
        return (x - mean) * jax.lax.rsqrt(var + LN_EPS) * g + b

    x = dot(state, p["w1_state"]) + dot(action, p["w1_action"]) + p["b1"]
    x = jnp.maximum(ln(x, p["g1"], p["be1"]), 0.0)
    x = dot(x, p["w2"]) + p["b2"]
    ns = state + x
    r = dot(ns, p["rw1"]) + p["rb1"]
    r = jnp.maximum(ln(r, p["rg1"], p["rbe1"]), 0.0)
    r = dot(r, p["rw2"]) + p["rb2"]
    r = ln(r, p["rg2"], p["rbe2"])
    return jnp.maximum(r + ns, 0.0)


if __name__ == "__main__":
    HIDDEN, ACTION, DYN_HIDDEN = 32, 8, 128

    key = jax.random.PRNGKey(0)
    k_state, k_action, k_params, k_state2, k_action2 = jax.random.split(key, 5)
    params = init_params(k_params, HIDDEN, ACTION, DYN_HIDDEN)

    # --- small-batch check (single grid step) ---
    B = 8
    state = jax.random.normal(k_state, (B, HIDDEN), jnp.float32)
    action = jax.nn.one_hot(jax.random.randint(k_action, (B,), 0, ACTION), ACTION,
                            dtype=jnp.float32)
    out = jax.block_until_ready(trading_dynamics_forward(state, action, params))
    ref = reference_forward(state, action, params)
    assert jnp.allclose(out, ref, atol=2e-3, rtol=2e-3), "mismatch vs JAX reference (B=8)"

    # --- multi-block check (exercises batch grid + batch padding) ---
    B2 = 300
    state2 = jax.random.normal(k_state2, (B2, HIDDEN), jnp.float32)
    action2 = jax.nn.one_hot(jax.random.randint(k_action2, (B2,), 0, ACTION), ACTION,
                             dtype=jnp.float32)
    out2 = jax.block_until_ready(
        trading_dynamics_forward(state2, action2, params, block_b=128))
    ref2 = reference_forward(state2, action2, params)
    assert jnp.allclose(out2, ref2, atol=2e-3, rtol=2e-3), "mismatch vs JAX reference (B=300)"

    print("KERNEL_OK")
</pallas_src>

<mosaic_0001>
module attributes {stable_mosaic.version = 11 : i64} {
  func.func @_dyn_kernel(%arg0: i32, %arg1: memref<8x128xf32, #tpu.memory_space<vmem>>, %arg2: memref<128x128xbf16, #tpu.memory_space<vmem>>, %arg3: memref<8x128xf32, #tpu.memory_space<vmem>>, %arg4: memref<128x128xbf16, #tpu.memory_space<vmem>>, %arg5: memref<8x128xf32, #tpu.memory_space<vmem>>, %arg6: memref<128x128xbf16, #tpu.memory_space<vmem>>, %arg7: memref<128x128xbf16, #tpu.memory_space<vmem>>, %arg8: memref<8x128xf32, #tpu.memory_space<vmem>>) attributes {dimension_semantics = [#tpu.dimension_semantics<parallel>], iteration_bounds = array<i64: 1>, scalar_prefetch = 0 : i64, scratch_operands = 0 : i64, tpu.core_type = #tpu.core_type<tc>, window_params = [{transform_indices = @transform_0, window_bounds = array<i64: 8, 128>}, {pipeline_mode = #tpu.pipeline_mode<synchronous>, transform_indices = @transform_1, window_bounds = array<i64: 128, 128>}, {pipeline_mode = #tpu.pipeline_mode<synchronous>, transform_indices = @transform_2, window_bounds = array<i64: 8, 128>}, {pipeline_mode = #tpu.pipeline_mode<synchronous>, transform_indices = @transform_3, window_bounds = array<i64: 128, 128>}, {pipeline_mode = #tpu.pipeline_mode<synchronous>, transform_indices = @transform_4, window_bounds = array<i64: 8, 128>}, {pipeline_mode = #tpu.pipeline_mode<synchronous>, transform_indices = @transform_5, window_bounds = array<i64: 128, 128>}, {pipeline_mode = #tpu.pipeline_mode<synchronous>, transform_indices = @transform_6, window_bounds = array<i64: 128, 128>}, {transform_indices = @transform_7, window_bounds = array<i64: 8, 128>}]} {
    %c0 = arith.constant 0 : index
    %c0_0 = arith.constant 0 : index
    %0 = vector.load %arg1[%c0, %c0_0] : memref<8x128xf32, #tpu.memory_space<vmem>>, vector<8x128xf32>
    %c0_1 = arith.constant 0 : index
    %c0_2 = arith.constant 0 : index
    %1 = vector.load %arg3[%c0_1, %c0_2] : memref<8x128xf32, #tpu.memory_space<vmem>>, vector<8x128xf32>
    %c0_3 = arith.constant 0 : index
    %c0_4 = arith.constant 0 : index
    %2 = vector.load %arg5[%c0_3, %c0_4] : memref<8x128xf32, #tpu.memory_space<vmem>>, vector<8x128xf32>
    %3 = vector.extract_strided_slice %1 {offsets = [0, 0], sizes = [1, 128], strides = [1, 1]} : vector<8x128xf32> to vector<1x128xf32>
    %4 = vector.extract_strided_slice %1 {offsets = [1, 0], sizes = [1, 128], strides = [1, 1]} : vector<8x128xf32> to vector<1x128xf32>
    %5 = vector.extract_strided_slice %1 {offsets = [2, 0], sizes = [1, 128], strides = [1, 1]} : vector<8x128xf32> to vector<1x128xf32>
    %6 = vector.extract_strided_slice %2 {offsets = [0, 0], sizes = [1, 128], strides = [1, 1]} : vector<8x128xf32> to vector<1x128xf32>
    %7 = vector.extract_strided_slice %2 {offsets = [1, 0], sizes = [1, 128], strides = [1, 1]} : vector<8x128xf32> to vector<1x128xf32>
    %8 = vector.extract_strided_slice %2 {offsets = [2, 0], sizes = [1, 128], strides = [1, 1]} : vector<8x128xf32> to vector<1x128xf32>
    %9 = vector.extract_strided_slice %2 {offsets = [3, 0], sizes = [1, 128], strides = [1, 1]} : vector<8x128xf32> to vector<1x128xf32>
    %10 = vector.extract_strided_slice %2 {offsets = [4, 0], sizes = [1, 128], strides = [1, 1]} : vector<8x128xf32> to vector<1x128xf32>
    %11 = vector.extract_strided_slice %2 {offsets = [5, 0], sizes = [1, 128], strides = [1, 1]} : vector<8x128xf32> to vector<1x128xf32>
    %12 = vector.extract_strided_slice %2 {offsets = [6, 0], sizes = [1, 128], strides = [1, 1]} : vector<8x128xf32> to vector<1x128xf32>
    %13 = arith.truncf %0 : vector<8x128xf32> to vector<8x128xbf16>
    %c0_5 = arith.constant 0 : index
    %c0_6 = arith.constant 0 : index
    %14 = vector.load %arg2[%c0_5, %c0_6] : memref<128x128xbf16, #tpu.memory_space<vmem>>, vector<128x128xbf16>
    %cst = arith.constant dense<0.000000e+00> : vector<8x128xf32>
    %15 = tpu.matmul %13, %14, %cst {dimension_numbers = #tpu.dot_dimension_numbers<[1], [0], [0], [1], [0, 0, 1, 1], [], []>} : vector<8x128xbf16>, vector<128x128xbf16>, vector<8x128xf32> -> vector<8x128xf32>
    %16 = vector.broadcast %3 : vector<1x128xf32> to vector<8x128xf32>
    %17 = arith.addf %15, %16 : vector<8x128xf32>
    %cst_7 = arith.constant dense<0.000000e+00> : vector<8xf32>
    %18 = vector.multi_reduction <add>, %17, %cst_7 [1] : vector<8x128xf32> to vector<8xf32>
    %19 = vector.shape_cast %18 : vector<8xf32> to vector<8x1xf32>
    %20 = arith.mulf %17, %17 : vector<8x128xf32>
    %cst_8 = arith.constant dense<0.000000e+00> : vector<8xf32>
    %21 = vector.multi_reduction <add>, %20, %cst_8 [1] : vector<8x128xf32> to vector<8xf32>
    %22 = vector.shape_cast %21 : vector<8xf32> to vector<8x1xf32>
    %cst_9 = arith.constant 7.812500e-03 : f32
    %23 = vector.broadcast %cst_9 : f32 to vector<8x1xf32>
    %24 = arith.mulf %19, %23 : vector<8x1xf32>
    %cst_10 = arith.constant 7.812500e-03 : f32
    %25 = vector.broadcast %cst_10 : f32 to vector<8x1xf32>
    %26 = arith.mulf %22, %25 : vector<8x1xf32>
    %27 = arith.mulf %24, %24 : vector<8x1xf32>
    %28 = arith.subf %26, %27 : vector<8x1xf32>
    %cst_11 = arith.constant 9.99999974E-6 : f32
    %29 = vector.broadcast %cst_11 : f32 to vector<8x1xf32>
    %30 = arith.addf %28, %29 : vector<8x1xf32>
    %31 = math.rsqrt %30 : vector<8x1xf32>
    %32 = vector.broadcast %24 : vector<8x1xf32> to vector<8x128xf32>
    %33 = arith.subf %17, %32 : vector<8x128xf32>
    %34 = vector.broadcast %31 : vector<8x1xf32> to vector<8x128xf32>
    %35 = arith.mulf %33, %34 : vector<8x128xf32>
    %36 = vector.broadcast %4 : vector<1x128xf32> to vector<8x128xf32>
    %37 = arith.mulf %35, %36 : vector<8x128xf32>
    %38 = vector.broadcast %5 : vector<1x128xf32> to vector<8x128xf32>
    %39 = arith.addf %37, %38 : vector<8x128xf32>
    %cst_12 = arith.constant 0.000000e+00 : f32
    %40 = vector.broadcast %cst_12 : f32 to vector<8x128xf32>
    %41 = arith.maximumf %39, %40 : vector<8x128xf32>
    %42 = arith.truncf %41 : vector<8x128xf32> to vector<8x128xbf16>
    %c0_13 = arith.constant 0 : index
    %c0_14 = arith.constant 0 : index
    %43 = vector.load %arg4[%c0_13, %c0_14] : memref<128x128xbf16, #tpu.memory_space<vmem>>, vector<128x128xbf16>
    %cst_15 = arith.constant dense<0.000000e+00> : vector<8x128xf32>
    %44 = tpu.matmul %42, %43, %cst_15 {dimension_numbers = #tpu.dot_dimension_numbers<[1], [0], [0], [1], [0, 0, 1, 1], [], []>} : vector<8x128xbf16>, vector<128x128xbf16>, vector<8x128xf32> -> vector<8x128xf32>
    %45 = vector.broadcast %6 : vector<1x128xf32> to vector<8x128xf32>
    %46 = arith.addf %44, %45 : vector<8x128xf32>
    %47 = tpu.iota {dimensions = array<i32: 1>} : vector<8x128xi32>
    %c32_i32 = arith.constant 32 : i32
    %48 = vector.broadcast %c32_i32 : i32 to vector<8x128xi32>
    %49 = arith.cmpi slt, %47, %48 : vector<8x128xi32>
    %cst_16 = arith.constant 0.000000e+00 : f32
    %50 = vector.broadcast %cst_16 : f32 to vector<8x128xf32>
    %51 = arith.select %49, %0, %50 : vector<8x128xi1>, vector<8x128xf32>
    %52 = arith.addf %51, %46 : vector<8x128xf32>
    %53 = arith.truncf %52 : vector<8x128xf32> to vector<8x128xbf16>
    %c0_17 = arith.constant 0 : index
    %c0_18 = arith.constant 0 : index
    %54 = vector.load %arg6[%c0_17, %c0_18] : memref<128x128xbf16, #tpu.memory_space<vmem>>, vector<128x128xbf16>
    %cst_19 = arith.constant dense<0.000000e+00> : vector<8x128xf32>
    %55 = tpu.matmul %53, %54, %cst_19 {dimension_numbers = #tpu.dot_dimension_numbers<[1], [0], [0], [1], [0, 0, 1, 1], [], []>} : vector<8x128xbf16>, vector<128x128xbf16>, vector<8x128xf32> -> vector<8x128xf32>
    %56 = vector.broadcast %7 : vector<1x128xf32> to vector<8x128xf32>
    %57 = arith.addf %55, %56 : vector<8x128xf32>
    %cst_20 = arith.constant dense<0.000000e+00> : vector<8xf32>
    %58 = vector.multi_reduction <add>, %57, %cst_20 [1] : vector<8x128xf32> to vector<8xf32>
    %59 = vector.shape_cast %58 : vector<8xf32> to vector<8x1xf32>
    %60 = arith.mulf %57, %57 : vector<8x128xf32>
    %cst_21 = arith.constant dense<0.000000e+00> : vector<8xf32>
    %61 = vector.multi_reduction <add>, %60, %cst_21 [1] : vector<8x128xf32> to vector<8xf32>
    %62 = vector.shape_cast %61 : vector<8xf32> to vector<8x1xf32>
    %cst_22 = arith.constant 3.125000e-02 : f32
    %63 = vector.broadcast %cst_22 : f32 to vector<8x1xf32>
    %64 = arith.mulf %59, %63 : vector<8x1xf32>
    %cst_23 = arith.constant 3.125000e-02 : f32
    %65 = vector.broadcast %cst_23 : f32 to vector<8x1xf32>
    %66 = arith.mulf %62, %65 : vector<8x1xf32>
    %67 = arith.mulf %64, %64 : vector<8x1xf32>
    %68 = arith.subf %66, %67 : vector<8x1xf32>
    %cst_24 = arith.constant 9.99999974E-6 : f32
    %69 = vector.broadcast %cst_24 : f32 to vector<8x1xf32>
    %70 = arith.addf %68, %69 : vector<8x1xf32>
    %71 = math.rsqrt %70 : vector<8x1xf32>
    %72 = vector.broadcast %64 : vector<8x1xf32> to vector<8x128xf32>
    %73 = arith.subf %57, %72 : vector<8x128xf32>
    %74 = vector.broadcast %71 : vector<8x1xf32> to vector<8x128xf32>
    %75 = arith.mulf %73, %74 : vector<8x128xf32>
    %76 = vector.broadcast %8 : vector<1x128xf32> to vector<8x128xf32>
    %77 = arith.mulf %75, %76 : vector<8x128xf32>
    %78 = vector.broadcast %9 : vector<1x128xf32> to vector<8x128xf32>
    %79 = arith.addf %77, %78 : vector<8x128xf32>
    %cst_25 = arith.constant 0.000000e+00 : f32
    %80 = vector.broadcast %cst_25 : f32 to vector<8x128xf32>
    %81 = arith.maximumf %79, %80 : vector<8x128xf32>
    %82 = arith.truncf %81 : vector<8x128xf32> to vector<8x128xbf16>
    %c0_26 = arith.constant 0 : index
    %c0_27 = arith.constant 0 : index
    %83 = vector.load %arg7[%c0_26, %c0_27] : memref<128x128xbf16, #tpu.memory_space<vmem>>, vector<128x128xbf16>
    %cst_28 = arith.constant dense<0.000000e+00> : vector<8x128xf32>
    %84 = tpu.matmul %82, %83, %cst_28 {dimension_numbers = #tpu.dot_dimension_numbers<[1], [0], [0], [1], [0, 0, 1, 1], [], []>} : vector<8x128xbf16>, vector<128x128xbf16>, vector<8x128xf32> -> vector<8x128xf32>
    %85 = vector.broadcast %10 : vector<1x128xf32> to vector<8x128xf32>
    %86 = arith.addf %84, %85 : vector<8x128xf32>
    %cst_29 = arith.constant dense<0.000000e+00> : vector<8xf32>
    %87 = vector.multi_reduction <add>, %86, %cst_29 [1] : vector<8x128xf32> to vector<8xf32>
    %88 = vector.shape_cast %87 : vector<8xf32> to vector<8x1xf32>
    %89 = arith.mulf %86, %86 : vector<8x128xf32>
    %cst_30 = arith.constant dense<0.000000e+00> : vector<8xf32>
    %90 = vector.multi_reduction <add>, %89, %cst_30 [1] : vector<8x128xf32> to vector<8xf32>
    %91 = vector.shape_cast %90 : vector<8xf32> to vector<8x1xf32>
    %cst_31 = arith.constant 3.125000e-02 : f32
    %92 = vector.broadcast %cst_31 : f32 to vector<8x1xf32>
    %93 = arith.mulf %88, %92 : vector<8x1xf32>
    %cst_32 = arith.constant 3.125000e-02 : f32
    %94 = vector.broadcast %cst_32 : f32 to vector<8x1xf32>
    %95 = arith.mulf %91, %94 : vector<8x1xf32>
    %96 = arith.mulf %93, %93 : vector<8x1xf32>
    %97 = arith.subf %95, %96 : vector<8x1xf32>
    %cst_33 = arith.constant 9.99999974E-6 : f32
    %98 = vector.broadcast %cst_33 : f32 to vector<8x1xf32>
    %99 = arith.addf %97, %98 : vector<8x1xf32>
    %100 = math.rsqrt %99 : vector<8x1xf32>
    %101 = vector.broadcast %93 : vector<8x1xf32> to vector<8x128xf32>
    %102 = arith.subf %86, %101 : vector<8x128xf32>
    %103 = vector.broadcast %100 : vector<8x1xf32> to vector<8x128xf32>
    %104 = arith.mulf %102, %103 : vector<8x128xf32>
    %105 = vector.broadcast %11 : vector<1x128xf32> to vector<8x128xf32>
    %106 = arith.mulf %104, %105 : vector<8x128xf32>
    %107 = vector.broadcast %12 : vector<1x128xf32> to vector<8x128xf32>
    %108 = arith.addf %106, %107 : vector<8x128xf32>
    %109 = arith.addf %108, %52 : vector<8x128xf32>
    %cst_34 = arith.constant 0.000000e+00 : f32
    %110 = vector.broadcast %cst_34 : f32 to vector<8x128xf32>
    %111 = arith.maximumf %109, %110 : vector<8x128xf32>
    %c0_35 = arith.constant 0 : index
    %c0_36 = arith.constant 0 : index
    %112 = vector.load %arg8[%c0_35, %c0_36] : memref<8x128xf32, #tpu.memory_space<vmem>>, vector<8x128xf32>
    tpu.vector_store %arg8[%c0_35, %c0_36], %111 {strides = array<i32>} : memref<8x128xf32, #tpu.memory_space<vmem>>, vector<8x128xf32>,
    return
  }
  func.func @transform_0(%arg0: i32) -> (i32, i32) {
    %c0_i32 = arith.constant 0 : i32
    %c0_i32_0 = arith.constant 0 : i32
    return %arg0, %c0_i32 : i32, i32
  }
  func.func @transform_1(%arg0: i32) -> (i32, i32) {
    %c0_i32 = arith.constant 0 : i32
    %c0_i32_0 = arith.constant 0 : i32
    %c0_i32_1 = arith.constant 0 : i32
    return %c0_i32, %c0_i32_0 : i32, i32
  }
  func.func @transform_2(%arg0: i32) -> (i32, i32) {
    %c0_i32 = arith.constant 0 : i32
    %c0_i32_0 = arith.constant 0 : i32
    %c0_i32_1 = arith.constant 0 : i32
    return %c0_i32, %c0_i32_0 : i32, i32
  }
  func.func @transform_3(%arg0: i32) -> (i32, i32) {
    %c0_i32 = arith.constant 0 : i32
    %c0_i32_0 = arith.constant 0 : i32
    %c0_i32_1 = arith.constant 0 : i32
    return %c0_i32, %c0_i32_0 : i32, i32
  }
  func.func @transform_4(%arg0: i32) -> (i32, i32) {
    %c0_i32 = arith.constant 0 : i32
    %c0_i32_0 = arith.constant 0 : i32
    %c0_i32_1 = arith.constant 0 : i32
    return %c0_i32, %c0_i32_0 : i32, i32
  }
  func.func @transform_5(%arg0: i32) -> (i32, i32) {
    %c0_i32 = arith.constant 0 : i32
    %c0_i32_0 = arith.constant 0 : i32
    %c0_i32_1 = arith.constant 0 : i32
    return %c0_i32, %c0_i32_0 : i32, i32
  }
  func.func @transform_6(%arg0: i32) -> (i32, i32) {
    %c0_i32 = arith.constant 0 : i32
    %c0_i32_0 = arith.constant 0 : i32
    %c0_i32_1 = arith.constant 0 : i32
    return %c0_i32, %c0_i32_0 : i32, i32
  }
  func.func @transform_7(%arg0: i32) -> (i32, i32) {
    %c0_i32 = arith.constant 0 : i32
    %c0_i32_0 = arith.constant 0 : i32
    return %arg0, %c0_i32 : i32, i32
  }
}

</mosaic_0001>

<llo_original>
// kernel: tpu_custom_call.1
$region0: #{tpu_custom_call.1}
  #allocation0 [shape = 'u32[]', space=smem, size = 0x4, offset = 0x4, fixed_abs, tag = 'smem constant byte address 0x4 - core index']
  #allocation1 [shape = 'u32[72,128]{1,0:T(1,128)}', space=vmem, size = 0x9000, scoped, tag = 'internal scratch']
  %s0 = inlined_call_operand.hbm [shape: f32[8,128], index: 0, kind: input, shape index: {}]
  %s1 = inlined_call_operand.hbm [shape: bf16[128,128], index: 1, kind: input, shape index: {}]
  %s2 = inlined_call_operand.hbm [shape: f32[8,128], index: 2, kind: input, shape index: {}]
  %s3 = inlined_call_operand.hbm [shape: bf16[128,128], index: 3, kind: input, shape index: {}]
  %s4 = inlined_call_operand.hbm [shape: f32[8,128], index: 4, kind: input, shape index: {}]
  %s5 = inlined_call_operand.hbm [shape: bf16[128,128], index: 5, kind: input, shape index: {}]
  %s6 = inlined_call_operand.hbm [shape: bf16[128,128], index: 6, kind: input, shape index: {}]
  %s7 = inlined_call_operand.hbm [shape: f32[8,128], index: 7, kind: output, shape index: {}]
  %s8 = sld [smem:[#allocation0]]
  $region66: #{tpu_custom_call.1} parent=0
    _
  %s10 = ssub.s32 1, %s8
  %s11 = scalar_select 0, %s10, %s8
  $region1: #{tpu_custom_call.1} parent=0
    #allocation2 [shape = 'u8[4096]{0}', space=vmem, size = 0x1000, scoped, tag = 'input window, operand 0, single buffered']
    #allocation3 [shape = 's32[1]{0}', space=sflag, size = 0x4, scoped, tag = 'scoped memory for tpu_custom_call.1']
    #allocation4 [shape = 's32[1]{0}', space=sflag, size = 0x4, scoped, tag = 'scoped memory for tpu_custom_call.1']
    #allocation5 [shape = 'u8[32768]{0}', space=vmem, size = 0x8000, scoped, tag = 'input window, operand 1, single buffered']
    #allocation6 [shape = 's32[1]{0}', space=sflag, size = 0x4, scoped, tag = 'scoped memory for tpu_custom_call.1']
    #allocation7 [shape = 'u8[4096]{0}', space=vmem, size = 0x1000, scoped, tag = 'input window, operand 2, single buffered']
    #allocation8 [shape = 'u8[32768]{0}', space=vmem, size = 0x8000, scoped, tag = 'input window, operand 3, single buffered']
    #allocation9 [shape = 's32[1]{0}', space=sflag, size = 0x4, scoped, tag = 'scoped memory for tpu_custom_call.1']
    #allocation10 [shape = 'u8[4096]{0}', space=vmem, size = 0x1000, scoped, tag = 'input window, operand 4, single buffered']
    #allocation11 [shape = 'u8[32768]{0}', space=vmem, size = 0x8000, scoped, tag = 'input window, operand 5, single buffered']
    #allocation12 [shape = 's32[1]{0}', space=sflag, size = 0x4, scoped, tag = 'scoped memory for tpu_custom_call.1']
    #allocation13 [shape = 'u8[32768]{0}', space=vmem, size = 0x8000, scoped, tag = 'input window, operand 6, single buffered']
    #allocation14 [shape = 'u8[4096]{0}', space=vmem, size = 0x1000, scoped, tag = 'output window, operand 0, single buffered']
    %12 = vsyncpa [#allocation3], 0
    %13 = vsyncpa [#allocation6], 0
    %14 = vsyncpa [#allocation9], 0
    %15 = vsyncpa [#allocation12], 0
    %16 = vsyncpa [#allocation4], 0
    // Predicated region
    $region2: #{tpu_custom_call.1} parent=1 // pred_check
      _
    $region3: #{tpu_custom_call.1} parent=1 // pred_check_branch
      %18 = sbr.rel (0) target = $region5
    $region4: #{tpu_custom_call.1} parent=1 // pred_region
      %20 = vsyncadd [#allocation3], 0
      %s22 = sshll.u32 %s0, 4
      %s23 = int_to_ptr.hbm [resolvable:$true] %s22
      %s24 = sshll.u32 [#allocation2], 4
      %s25 = int_to_ptr.vmem [resolvable:$true] %s24
      %27 = dma.hbm_to_vmem [thread:$0]  %s23, 128, %s25, [#allocation3]
    $region5: #{tpu_custom_call.1} parent=1 // pred_fallthru
      _
    // Predicated region
    $region6: #{tpu_custom_call.1} parent=1 // pred_check
      _
    $region7: #{tpu_custom_call.1} parent=1 // pred_check_branch
      %29 = sbr.rel (0) target = $region9
    $region8: #{tpu_custom_call.1} parent=1 // pred_region
      %31 = vsyncadd [#allocation6], 0
      %s32 = sshll.u32 %s1, 4
      %s33 = int_to_ptr.hbm [resolvable:$true] %s32
      %s34 = sshll.u32 [#allocation5], 4
      %s35 = int_to_ptr.vmem [resolvable:$true] %s34
      %40 = dma.hbm_to_vmem [thread:$0]  %s33, 1024, %s35, [#allocation6], 64, 64, 4
    $region9: #{tpu_custom_call.1} parent=1 // pred_fallthru
      _
    // Predicated region
    $region10: #{tpu_custom_call.1} parent=1 // pred_check
      _
    $region11: #{tpu_custom_call.1} parent=1 // pred_check_branch
      %42 = sbr.rel (0) target = $region13
    $region12: #{tpu_custom_call.1} parent=1 // pred_region
      %44 = vsyncadd [#allocation6], 0
      %s46 = sshll.u32 %s2, 4
      %s47 = int_to_ptr.hbm [resolvable:$true] %s46
      %s48 = sshll.u32 [#allocation7], 4
      %s49 = int_to_ptr.vmem [resolvable:$true] %s48
      %51 = dma.hbm_to_vmem [thread:$0]  %s47, 128, %s49, [#allocation6]
    $region13: #{tpu_custom_call.1} parent=1 // pred_fallthru
      _
    // Predicated region
    $region14: #{tpu_custom_call.1} parent=1 // pred_check
      _
    $region15: #{tpu_custom_call.1} parent=1 // pred_check_branch
      %53 = sbr.rel (0) target = $region17
    $region16: #{tpu_custom_call.1} parent=1 // pred_region
      %55 = vsyncadd [#allocation9], 0
      %s56 = sshll.u32 %s3, 4
      %s57 = int_to_ptr.hbm [resolvable:$true] %s56
      %s58 = sshll.u32 [#allocation8], 4
      %s59 = int_to_ptr.vmem [resolvable:$true] %s58
      %64 = dma.hbm_to_vmem [thread:$0]  %s57, 1024, %s59, [#allocation9], 64, 64, 4
    $region17: #{tpu_custom_call.1} parent=1 // pred_fallthru
      _
    // Predicated region
    $region18: #{tpu_custom_call.1} parent=1 // pred_check
      _
    $region19: #{tpu_custom_call.1} parent=1 // pred_check_branch
      %66 = sbr.rel (0) target = $region21
    $region20: #{tpu_custom_call.1} parent=1 // pred_region
      %68 = vsyncadd [#allocation9], 0
      %s70 = sshll.u32 %s4, 4
      %s71 = int_to_ptr.hbm [resolvable:$true] %s70
      %s72 = sshll.u32 [#allocation10], 4
      %s73 = int_to_ptr.vmem [resolvable:$true] %s72
      %75 = dma.hbm_to_vmem [thread:$0]  %s71, 128, %s73, [#allocation9]
    $region21: #{tpu_custom_call.1} parent=1 // pred_fallthru
      _
    // Predicated region
    $region22: #{tpu_custom_call.1} parent=1 // pred_check
      _
    $region23: #{tpu_custom_call.1} parent=1 // pred_check_branch
      %77 = sbr.rel (0) target = $region25
    $region24: #{tpu_custom_call.1} parent=1 // pred_region
      %79 = vsyncadd [#allocation12], 0
      %s80 = sshll.u32 %s5, 4
      %s81 = int_to_ptr.hbm [resolvable:$true] %s80
      %s82 = sshll.u32 [#allocation11], 4
      %s83 = int_to_ptr.vmem [resolvable:$true] %s82
      %88 = dma.hbm_to_vmem [thread:$0]  %s81, 1024, %s83, [#allocation12], 64, 64, 4
    $region25: #{tpu_custom_call.1} parent=1 // pred_fallthru
      _
    // Predicated region
    $region26: #{tpu_custom_call.1} parent=1 // pred_check
      _
    $region27: #{tpu_custom_call.1} parent=1 // pred_check_branch
      %90 = sbr.rel (0) target = $region29
    $region28: #{tpu_custom_call.1} parent=1 // pred_region
      %92 = vsyncadd [#allocation12], 0
      %s93 = sshll.u32 %s6, 4
      %s94 = int_to_ptr.hbm [resolvable:$true] %s93
      %s95 = sshll.u32 [#allocation13], 4
      %s96 = int_to_ptr.vmem [resolvable:$true] %s95
      %101 = dma.hbm_to_vmem [thread:$0]  %s94, 1024, %s96, [#allocation12], 64, 64, 4
    $region29: #{tpu_custom_call.1} parent=1 // pred_fallthru
      _
    // Predicated region
    $region30: #{tpu_custom_call.1} parent=1 // pred_check
      _
    $region31: #{tpu_custom_call.1} parent=1 // pred_check_branch
      %103 = sbr.rel (0) target = $region33
    $region32: #{tpu_custom_call.1} parent=1 // pred_region
      %105 = dma.done [#allocation3], 128
    $region33: #{tpu_custom_call.1} parent=1 // pred_fallthru
      _
    // Predicated region
    $region34: #{tpu_custom_call.1} parent=1 // pred_check
      _
    $region35: #{tpu_custom_call.1} parent=1 // pred_check_branch
      %107 = sbr.rel (0) target = $region37
    $region36: #{tpu_custom_call.1} parent=1 // pred_region
      %109 = dma.done [#allocation6], 1024
    $region37: #{tpu_custom_call.1} parent=1 // pred_fallthru
      _
    // Predicated region
    $region38: #{tpu_custom_call.1} parent=1 // pred_check
      _
    $region39: #{tpu_custom_call.1} parent=1 // pred_check_branch
      %111 = sbr.rel (0) target = $region41
    $region40: #{tpu_custom_call.1} parent=1 // pred_region
      %113 = dma.done [#allocation6], 128
    $region41: #{tpu_custom_call.1} parent=1 // pred_fallthru
      _
    // Predicated region
    $region42: #{tpu_custom_call.1} parent=1 // pred_check
      _
    $region43: #{tpu_custom_call.1} parent=1 // pred_check_branch
      %115 = sbr.rel (0) target = $region45
    $region44: #{tpu_custom_call.1} parent=1 // pred_region
      %117 = dma.done [#allocation9], 1024
    $region45: #{tpu_custom_call.1} parent=1 // pred_fallthru
      _
    // Predicated region
    $region46: #{tpu_custom_call.1} parent=1 // pred_check
      _
    $region47: #{tpu_custom_call.1} parent=1 // pred_check_branch
      %119 = sbr.rel (0) target = $region49
    $region48: #{tpu_custom_call.1} parent=1 // pred_region
      %121 = dma.done [#allocation9], 128
    $region49: #{tpu_custom_call.1} parent=1 // pred_fallthru
      _
    // Predicated region
    $region50: #{tpu_custom_call.1} parent=1 // pred_check
      _
    $region51: #{tpu_custom_call.1} parent=1 // pred_check_branch
      %123 = sbr.rel (0) target = $region53
    $region52: #{tpu_custom_call.1} parent=1 // pred_region
      %125 = dma.done [#allocation12], 1024
    $region53: #{tpu_custom_call.1} parent=1 // pred_fallthru
      _
    // Predicated region
    $region54: #{tpu_custom_call.1} parent=1 // pred_check
      _
    $region55: #{tpu_custom_call.1} parent=1 // pred_check_branch
      %127 = sbr.rel (0) target = $region57
    $region56: #{tpu_custom_call.1} parent=1 // pred_region
      %129 = dma.done [#allocation12], 1024
    $region57: #{tpu_custom_call.1} parent=1 // pred_fallthru
      _
    %v130 = vld [vmem:[#allocation2] sm:$0xff]
    %v131 = vld [vmem:[#allocation7] sm:$0xff]
    %v132 = vld [vmem:[#allocation10] sm:$0xff]
    %v133 = vpack.c.bf16 %v130, %v130
    %v134 = vld [vmem:[#allocation5] sm:$0xf]
    %v135 = vld [vmem:[#allocation5 + $0x4] sm:$0xf]
    %v136 = vld [vmem:[#allocation5 + $0x8] sm:$0xf]
    %v137 = vld [vmem:[#allocation5 + $0xc] sm:$0xf]
    %v138 = vld [vmem:[#allocation5 + $0x10] sm:$0xf]
    %v139 = vld [vmem:[#allocation5 + $0x14] sm:$0xf]
    %v140 = vld [vmem:[#allocation5 + $0x18] sm:$0xf]
    %v141 = vld [vmem:[#allocation5 + $0x1c] sm:$0xf]
    %v142 = vld [vmem:[#allocation5 + $0x20] sm:$0xf]
    %v143 = vld [vmem:[#allocation5 + $0x24] sm:$0xf]
    %v144 = vld [vmem:[#allocation5 + $0x28] sm:$0xf]
    %v145 = vld [vmem:[#allocation5 + $0x2c] sm:$0xf]
    %v146 = vld [vmem:[#allocation5 + $0x30] sm:$0xf]
    %v147 = vld [vmem:[#allocation5 + $0x34] sm:$0xf]
    %v148 = vld [vmem:[#allocation5 + $0x38] sm:$0xf]
    %v149 = vld [vmem:[#allocation5 + $0x3c] sm:$0xf]
    %v150 = vperm.slane %v131, 0
    %v167 = vunpack.c.l.b16 %v134
    %v168 = vunpack.c.l.b16 %v135
    %v169 = vunpack.c.l.b16 %v136
    %v170 = vunpack.c.l.b16 %v137
    %v171 = vunpack.c.l.b16 %v138
    %v172 = vunpack.c.l.b16 %v139
    %v173 = vunpack.c.l.b16 %v140
    %v174 = vunpack.c.l.b16 %v141
    %v175 = vunpack.c.l.b16 %v142
    %v176 = vunpack.c.l.b16 %v143
    %v177 = vunpack.c.l.b16 %v144
    %v178 = vunpack.c.l.b16 %v145
    %v179 = vunpack.c.l.b16 %v146
    %v180 = vunpack.c.l.b16 %v147
    %v181 = vunpack.c.l.b16 %v148
    %v182 = vunpack.c.l.b16 %v149
    %v183 = vpack.c.b16 %v168, %v167
    %v184 = vpack.c.b16 %v170, %v169
    %v185 = vpack.c.b16 %v172, %v171
    %v186 = vpack.c.b16 %v174, %v173
    %v187 = vpack.c.b16 %v176, %v175
    %v188 = vpack.c.b16 %v178, %v177
    %v189 = vpack.c.b16 %v180, %v179
    %v190 = vpack.c.b16 %v182, %v181
    %199 = vmatpush.bf16.msra.mxu0 %v190
    %200 = vmatpush.bf16.msra.mxu0 %v189
    %201 = vmatpush.bf16.msra.mxu0 %v188
    %202 = vmatpush.bf16.msra.mxu0 %v187
    %203 = vmatpush.bf16.msra.mxu0 %v186
    %204 = vmatpush.bf16.msra.mxu0 %v185
    %205 = vmatpush.bf16.msra.mxu0 %v184
    %206 = vmatpush.bf16.msra.mxu0 %v183
    %207 = vmatmul.bf16.gmra.mxu0 %v133
    %v208 = vpop.f32.mrf.mxu0
    %v209 = vadd.f32 %v150, %v208
    %v210 = vpop.f32.mrf.mxu0
    %211 = vdwg.mxu0
    %212 = vadd.xlane.f32.xlu0 %v209
    %v213 = vpop.xlane.xlu0 %212
    %v214 = vmul.f32 %v209, %v209
    %215 = vadd.xlane.f32.xlu0 %v214
    %v216 = vpop.xlane.xlu0 %215
    %v217 = vmul.f32 %v213, 0.0078125
    %v218 = vmul.f32 %v216, 0.0078125
    %v219 = vmul.f32 %v217, %v217
    %v220 = vsub.f32 %v218, %v219
    %v221 = vadd.f32 %v220, 1e-05
    %v222 = vrsqrt.pop %v221
    %v223 = vmul.f32 %v222, %v221
    %v224 = vmul.f32 %v223, %v222
    %v225 = vmul.f32 0.5, %v224
    %v226 = vsub.f32 1.5, %v225
    %v227 = vmul.f32 %v222, %v226
    %vm228 = vweird.f32 %v221
    %vm229 = vweird.f32 %v222
    %vm230 = vmor %vm228, %vm229
    %v231 = vsel %vm230, %v222, %v227
    %v232 = vsub.f32 %v209, %v217
    %v233 = vmul.f32 %v232, %v231
    %v234 = vperm.slane %v131, 1
    %v235 = vmul.f32 %v233, %v234
    %v236 = vperm.slane %v131, 2
    %v237 = vadd.f32 %v235, %v236
    %v238 = vmax.f32 %v237, 0.0
    %v239 = vpack.c.bf16 %v238, %v238
    %v240 = vld [vmem:[#allocation8] sm:$0xf]
    %v241 = vld [vmem:[#allocation8 + $0x4] sm:$0xf]
    %v242 = vld [vmem:[#allocation8 + $0x8] sm:$0xf]
    %v243 = vld [vmem:[#allocation8 + $0xc] sm:$0xf]
    %v244 = vld [vmem:[#allocation8 + $0x10] sm:$0xf]
    %v245 = vld [vmem:[#allocation8 + $0x14] sm:$0xf]
    %v246 = vld [vmem:[#allocation8 + $0x18] sm:$0xf]
    %v247 = vld [vmem:[#allocation8 + $0x1c] sm:$0xf]
    %v248 = vld [vmem:[#allocation8 + $0x20] sm:$0xf]
    %v249 = vld [vmem:[#allocation8 + $0x24] sm:$0xf]
    %v250 = vld [vmem:[#allocation8 + $0x28] sm:$0xf]
    %v251 = vld [vmem:[#allocation8 + $0x2c] sm:$0xf]
    %v252 = vld [vmem:[#allocation8 + $0x30] sm:$0xf]
    %v253 = vld [vmem:[#allocation8 + $0x34] sm:$0xf]
    %v254 = vld [vmem:[#allocation8 + $0x38] sm:$0xf]
    %v255 = vld [vmem:[#allocation8 + $0x3c] sm:$0xf]
    %v256 = vperm.slane %v132, 0
    %v273 = vunpack.c.l.b16 %v240
    %v274 = vunpack.c.l.b16 %v241
    %v275 = vunpack.c.l.b16 %v242
    %v276 = vunpack.c.l.b16 %v243
    %v277 = vunpack.c.l.b16 %v244
    %v278 = vunpack.c.l.b16 %v245
    %v279 = vunpack.c.l.b16 %v246
    %v280 = vunpack.c.l.b16 %v247
    %v281 = vunpack.c.l.b16 %v248
    %v282 = vunpack.c.l.b16 %v249
    %v283 = vunpack.c.l.b16 %v250
    %v284 = vunpack.c.l.b16 %v251
    %v285 = vunpack.c.l.b16 %v252
    %v286 = vunpack.c.l.b16 %v253
    %v287 = vunpack.c.l.b16 %v254
    %v288 = vunpack.c.l.b16 %v255
    %v289 = vpack.c.b16 %v274, %v273
    %v290 = vpack.c.b16 %v276, %v275
    %v291 = vpack.c.b16 %v278, %v277
    %v292 = vpack.c.b16 %v280, %v279
    %v293 = vpack.c.b16 %v282, %v281
    %v294 = vpack.c.b16 %v284, %v283
    %v295 = vpack.c.b16 %v286, %v285
    %v296 = vpack.c.b16 %v288, %v287
    %305 = vmatpush.bf16.msra.mxu0 %v296
    %306 = vmatpush.bf16.msra.mxu0 %v295
    %307 = vmatpush.bf16.msra.mxu0 %v294
    %308 = vmatpush.bf16.msra.mxu0 %v293
    %309 = vmatpush.bf16.msra.mxu0 %v292
    %310 = vmatpush.bf16.msra.mxu0 %v291
    %311 = vmatpush.bf16.msra.mxu0 %v290
    %312 = vmatpush.bf16.msra.mxu0 %v289
    %313 = vmatmul.bf16.gmra.mxu0 %v239
    %v314 = vpop.f32.mrf.mxu0
    %v315 = vadd.f32 %v256, %v314
    %v316 = vpop.f32.mrf.mxu0
    %317 = vdwg.mxu0
    %v318 = vlaneseq
    %v319 = vand.u32 %v318, 127
    %vm320 = vcmp.lt.s32.totalorder %v319, 32
    %v321 = vsel %vm320, %v130, 0.0
    %v322 = vadd.f32 %v321, %v315
    %v323 = vpack.c.bf16 %v322, %v322
    %v324 = vld [vmem:[#allocation11] sm:$0xf]
    %v325 = vld [vmem:[#allocation11 + $0x4] sm:$0xf]
    %v326 = vld [vmem:[#allocation11 + $0x8] sm:$0xf]
    %v327 = vld [vmem:[#allocation11 + $0xc] sm:$0xf]
    %v328 = vld [vmem:[#allocation11 + $0x10] sm:$0xf]
    %v329 = vld [vmem:[#allocation11 + $0x14] sm:$0xf]
    %v330 = vld [vmem:[#allocation11 + $0x18] sm:$0xf]
    %v331 = vld [vmem:[#allocation11 + $0x1c] sm:$0xf]
    %v332 = vld [vmem:[#allocation11 + $0x20] sm:$0xf]
    %v333 = vld [vmem:[#allocation11 + $0x24] sm:$0xf]
    %v334 = vld [vmem:[#allocation11 + $0x28] sm:$0xf]
    %v335 = vld [vmem:[#allocation11 + $0x2c] sm:$0xf]
    %v336 = vld [vmem:[#allocation11 + $0x30] sm:$0xf]
    %v337 = vld [vmem:[#allocation11 + $0x34] sm:$0xf]
    %v338 = vld [vmem:[#allocation11 + $0x38] sm:$0xf]
    %v339 = vld [vmem:[#allocation11 + $0x3c] sm:$0xf]
    %v340 = vperm.slane %v132, 1
    %v357 = vunpack.c.l.b16 %v324
    %v358 = vunpack.c.l.b16 %v325
    %v359 = vunpack.c.l.b16 %v326
    %v360 = vunpack.c.l.b16 %v327
    %v361 = vunpack.c.l.b16 %v328
    %v362 = vunpack.c.l.b16 %v329
    %v363 = vunpack.c.l.b16 %v330
    %v364 = vunpack.c.l.b16 %v331
    %v365 = vunpack.c.l.b16 %v332
    %v366 = vunpack.c.l.b16 %v333
    %v367 = vunpack.c.l.b16 %v334
    %v368 = vunpack.c.l.b16 %v335
    %v369 = vunpack.c.l.b16 %v336
    %v370 = vunpack.c.l.b16 %v337
    %v371 = vunpack.c.l.b16 %v338
    %v372 = vunpack.c.l.b16 %v339
    %v373 = vpack.c.b16 %v358, %v357
    %v374 = vpack.c.b16 %v360, %v359
    %v375 = vpack.c.b16 %v362, %v361
    %v376 = vpack.c.b16 %v364, %v363
    %v377 = vpack.c.b16 %v366, %v365
    %v378 = vpack.c.b16 %v368, %v367
    %v379 = vpack.c.b16 %v370, %v369
    %v380 = vpack.c.b16 %v372, %v371
    %389 = vmatpush.bf16.msra.mxu0 %v380
    %390 = vmatpush.bf16.msra.mxu0 %v379
    %391 = vmatpush.bf16.msra.mxu0 %v378
    %392 = vmatpush.bf16.msra.mxu0 %v377
    %393 = vmatpush.bf16.msra.mxu0 %v376
    %394 = vmatpush.bf16.msra.mxu0 %v375
    %395 = vmatpush.bf16.msra.mxu0 %v374
    %396 = vmatpush.bf16.msra.mxu0 %v373
    %397 = vmatmul.bf16.gmra.mxu0 %v323
    %v398 = vpop.f32.mrf.mxu0
    %v399 = vadd.f32 %v340, %v398
    %v400 = vpop.f32.mrf.mxu0
    %401 = vdwg.mxu0
    %402 = vadd.xlane.f32.xlu0 %v399
    %v403 = vpop.xlane.xlu0 %402
    %v404 = vmul.f32 %v399, %v399
    %405 = vadd.xlane.f32.xlu0 %v404
    %v406 = vpop.xlane.xlu0 %405
    %v407 = vmul.f32 %v403, 0.03125
    %v408 = vmul.f32 %v406, 0.03125
    %v409 = vmul.f32 %v407, %v407
    %v410 = vsub.f32 %v408, %v409
    %v411 = vadd.f32 %v410, 1e-05
    %v412 = vrsqrt.pop %v411
    %v413 = vmul.f32 %v412, %v411
    %v414 = vmul.f32 %v413, %v412
    %v415 = vmul.f32 0.5, %v414
    %v416 = vsub.f32 1.5, %v415
    %v417 = vmul.f32 %v412, %v416
    %vm418 = vweird.f32 %v411
    %vm419 = vweird.f32 %v412
    %vm420 = vmor %vm418, %vm419
    %v421 = vsel %vm420, %v412, %v417
    %v422 = vsub.f32 %v399, %v407
    %v423 = vmul.f32 %v422, %v421
    %v424 = vperm.slane %v132, 2
    %v425 = vmul.f32 %v423, %v424
    %v426 = vperm.slane %v132, 3
    %v427 = vadd.f32 %v425, %v426
    %v428 = vmax.f32 %v427, 0.0
    %v429 = vpack.c.bf16 %v428, %v428
    %v430 = vld [vmem:[#allocation13] sm:$0xf]
    %v431 = vld [vmem:[#allocation13 + $0x4] sm:$0xf]
    %v432 = vld [vmem:[#allocation13 + $0x8] sm:$0xf]
    %v433 = vld [vmem:[#allocation13 + $0xc] sm:$0xf]
    %v434 = vld [vmem:[#allocation13 + $0x10] sm:$0xf]
    %v435 = vld [vmem:[#allocation13 + $0x14] sm:$0xf]
    %v436 = vld [vmem:[#allocation13 + $0x18] sm:$0xf]
    %v437 = vld [vmem:[#allocation13 + $0x1c] sm:$0xf]
    %v438 = vld [vmem:[#allocation13 + $0x20] sm:$0xf]
    %v439 = vld [vmem:[#allocation13 + $0x24] sm:$0xf]
    %v440 = vld [vmem:[#allocation13 + $0x28] sm:$0xf]
    %v441 = vld [vmem:[#allocation13 + $0x2c] sm:$0xf]
    %v442 = vld [vmem:[#allocation13 + $0x30] sm:$0xf]
    %v443 = vld [vmem:[#allocation13 + $0x34] sm:$0xf]
    %v444 = vld [vmem:[#allocation13 + $0x38] sm:$0xf]
    %v445 = vld [vmem:[#allocation13 + $0x3c] sm:$0xf]
    %v446 = vperm.slane %v132, 4
    %v463 = vunpack.c.l.b16 %v430
    %v464 = vunpack.c.l.b16 %v431
    %v465 = vunpack.c.l.b16 %v432
    %v466 = vunpack.c.l.b16 %v433
    %v467 = vunpack.c.l.b16 %v434
    %v468 = vunpack.c.l.b16 %v435
    %v469 = vunpack.c.l.b16 %v436
    %v470 = vunpack.c.l.b16 %v437
    %v471 = vunpack.c.l.b16 %v438
    %v472 = vunpack.c.l.b16 %v439
    %v473 = vunpack.c.l.b16 %v440
    %v474 = vunpack.c.l.b16 %v441
    %v475 = vunpack.c.l.b16 %v442
    %v476 = vunpack.c.l.b16 %v443
    %v477 = vunpack.c.l.b16 %v444
    %v478 = vunpack.c.l.b16 %v445
    %v479 = vpack.c.b16 %v464, %v463
    %v480 = vpack.c.b16 %v466, %v465
    %v481 = vpack.c.b16 %v468, %v467
    %v482 = vpack.c.b16 %v470, %v469
    %v483 = vpack.c.b16 %v472, %v471
    %v484 = vpack.c.b16 %v474, %v473
    %v485 = vpack.c.b16 %v476, %v475
    %v486 = vpack.c.b16 %v478, %v477
    %495 = vmatpush.bf16.msra.mxu0 %v486
    %496 = vmatpush.bf16.msra.mxu0 %v485
    %497 = vmatpush.bf16.msra.mxu0 %v484
    %498 = vmatpush.bf16.msra.mxu0 %v483
    %499 = vmatpush.bf16.msra.mxu0 %v482
    %500 = vmatpush.bf16.msra.mxu0 %v481
    %501 = vmatpush.bf16.msra.mxu0 %v480
    %502 = vmatpush.bf16.msra.mxu0 %v479
    %503 = vmatmul.bf16.gmra.mxu0 %v429
    %v504 = vpop.f32.mrf.mxu0
    %v505 = vadd.f32 %v446, %v504
    %v506 = vpop.f32.mrf.mxu0
    %507 = vdwg.mxu0
    %508 = vadd.xlane.f32.xlu0 %v505
    %v509 = vpop.xlane.xlu0 %508
    %v510 = vmul.f32 %v505, %v505
    %511 = vadd.xlane.f32.xlu0 %v510
    %v512 = vpop.xlane.xlu0 %511
    %v513 = vmul.f32 %v509, 0.03125
    %v514 = vmul.f32 %v512, 0.03125
    %v515 = vmul.f32 %v513, %v513
    %v516 = vsub.f32 %v514, %v515
    %v517 = vadd.f32 %v516, 1e-05
    %v518 = vrsqrt.pop %v517
    %v519 = vmul.f32 %v518, %v517
    %v520 = vmul.f32 %v519, %v518
    %v521 = vmul.f32 0.5, %v520
    %v522 = vsub.f32 1.5, %v521
    %v523 = vmul.f32 %v518, %v522
    %vm524 = vweird.f32 %v517
    %vm525 = vweird.f32 %v518
    %vm526 = vmor %vm524, %vm525
    %v527 = vsel %vm526, %v518, %v523
    %v528 = vsub.f32 %v505, %v513
    %v529 = vmul.f32 %v528, %v527
    %v530 = vperm.slane %v132, 5
    %v531 = vmul.f32 %v529, %v530
    %v532 = vperm.slane %v132, 6
    %v533 = vadd.f32 %v531, %v532
    %v534 = vadd.f32 %v533, %v322
    %v535 = vmax.f32 %v534, 0.0
    %536 = vst [vmem:[#allocation14] sm:$0xff] %v535
    // Predicated region
    $region58: #{tpu_custom_call.1} parent=1 // pred_check
      _
    $region59: #{tpu_custom_call.1} parent=1 // pred_check_branch
      %538 = sbr.rel (0) target = $region61
    $region60: #{tpu_custom_call.1} parent=1 // pred_region
      %540 = vsyncadd [#allocation4], 0
      %s542 = sshll.u32 [#allocation14], 4
      %s543 = int_to_ptr.vmem [resolvable:$true] %s542
      %s544 = sshll.u32 %s7, 4
      %s545 = int_to_ptr.hbm [resolvable:$true] %s544
      %547 = dma.vmem_to_hbm [thread:$0]  %s543, 128, %s545, [#allocation4]
    $region61: #{tpu_custom_call.1} parent=1 // pred_fallthru
      _
    // Predicated region
    $region62: #{tpu_custom_call.1} parent=1 // pred_check
      _
    $region63: #{tpu_custom_call.1} parent=1 // pred_check_branch
      %549 = sbr.rel (0) target = $region65
    $region64: #{tpu_custom_call.1} parent=1 // pred_region
      %551 = dma.done [#allocation4], 128
    $region65: #{tpu_custom_call.1} parent=1 // pred_fallthru
      _
    %552 = vsyncpa [#allocation3], 1
    %553 = vsyncpa [#allocation6], 1
    %554 = vsyncpa [#allocation9], 1
    %555 = vsyncpa [#allocation12], 1
    %556 = vsyncpa [#allocation4], 1

</llo_original>
